<compile_context>
chip_gen: v6e
topology: v6e:2x2x1
jax: 0.10.0
libtpu: 0.0.40
codegen_flags: <defaults>
</compile_context>

<pallas_src>
import jax
import jax.numpy as jnp
from jax import lax
from jax.experimental import pallas as pl
from jax.experimental.pallas import tpu as pltpu


def _discriminator_kernel(x_ref, w1_ref, b1_ref, w2_ref, b2_ref, out_ref):
    # x:  (TB, N)  native batch-major tile
    # w1: (H, N)   b1: (H, 1)   w2: (H, 1)   b2: SMEM (1, 1)   out: (1, TB)

    # Linear 1 + ReLU.  Contract the minor (N) dims of both operands (A @ B^T
    # form, MXU-native) so the result is already (H, TB): batch lane-dense,
    # no explicit transpose needed anywhere in the kernel.
    h = lax.dot_general(
        w1_ref[...], x_ref[...],
        dimension_numbers=(((1,), (1,)), ((), ())),
        preferred_element_type=jnp.float32)               # (H, TB)
    h = jnp.maximum(h + b1_ref[...], 0.0)                  # bias broadcast over lanes

    # Linear 2 on VPU + XLU (mul + sublane reduce) instead of a 1-row MXU op.
    z = jnp.sum(h * w2_ref[...], axis=0, keepdims=True) + b2_ref[0, 0]   # (1, TB)

    # Sigmoid on the EUP path; lane-dense unmasked store.
    out_ref[...] = jax.nn.sigmoid(z).astype(out_ref.dtype)


_VMEM_BUDGET = 20 * 1024 * 1024   # target working-set bytes for streamed buffers
_VMEM_LIMIT = 48 * 1024 * 1024    # explicit scoped-VMEM limit (< v7x 64 MiB physical)


def _pick_batch_tile(n_series, hidden, vmem_budget_bytes):
    """Largest 128-aligned batch tile that fits the VMEM budget (f32)."""
    # Per-batch-row bytes:
    #   x double-buffer : minor dim pads to a 128-lane multiple in VMEM
    #   h + temporaries : ~3 live copies in the (H, TB) orientation
    #   out double-buf  : (1, TB) pads to 8 sublanes
    lanes = ((n_series + 127) // 128) * 128
    per_row = 2 * lanes * 4 + 3 * hidden * 4 + 2 * 8 * 4
    tb = (vmem_budget_bytes // per_row) // 128 * 128
    return max(128, int(tb))


def weight_discriminator(x, w1, b1, w2, b2, *, tb=None,
                         vmem_budget_bytes=_VMEM_BUDGET,
                         core_parallel=False):
    """Fused MLP discriminator.

    x : (B, n_series) float32          (native layout, streamed as-is)
    w1: (32, n_series) float32         (PyTorch Linear weight layout, out x in)
    b1: (32,)          float32
    w2: (1, 32)        float32
    b2: (1,)           float32
    returns (B, 1) float32 in [0, 1].
    """
    B, N = x.shape
    H = w1.shape[0]  # hidden = 32

    # ---- batch tile: biggest that fits the VMEM budget -------------------
    TB = tb if tb is not None else _pick_batch_tile(N, H, vmem_budget_bytes)
    if TB >= B:
        TB = B                                    # single tile == full array dim
    else:
        TB = max(128, (TB // 128) * 128)          # multi-tile: 128-lane aligned
    grid = (pl.cdiv(B, TB),)                      # ragged last block handled by Pallas

    # Params in the kernel's column layout (tiny, VMEM-resident across steps).
    b1c = b1.reshape(H, 1)
    w2c = w2.reshape(H, 1)
    b2s = b2.reshape(1, 1)

    cost = pl.CostEstimate(
        flops=2 * B * N * H + 2 * B * H,
        transcendentals=B,
        bytes_accessed=4 * (B * N + B + H * N + 2 * H + 1),
    )

    # v7x: set core_parallel=True to shard the batch axis across both TCs.
    batch_sem = pltpu.CORE_PARALLEL if core_parallel else "parallel"

    out = pl.pallas_call(
        _discriminator_kernel,
        out_shape=jax.ShapeDtypeStruct((1, B), jnp.float32),
        grid_spec=pltpu.PrefetchScalarGridSpec(
            num_scalar_prefetch=0,
            grid=grid,
            in_specs=[
                # streamed / double-buffered native-layout batch tile
                pl.BlockSpec((TB, N), lambda i: (i, 0)),
                # weights & biases: constant block index -> VMEM-resident
                pl.BlockSpec((H, N), lambda i: (0, 0)),
                pl.BlockSpec((H, 1), lambda i: (0, 0)),
                pl.BlockSpec((H, 1), lambda i: (0, 0)),
                # scalar bias via SMEM (no padded VMEM tile / extra DMA)
                pl.BlockSpec(memory_space=pltpu.MemorySpace.SMEM),
            ],
            out_specs=pl.BlockSpec((1, TB), lambda i: (0, i)),
        ),
        compiler_params=pltpu.CompilerParams(
            dimension_semantics=(batch_sem,),
            vmem_limit_bytes=_VMEM_LIMIT,
        ),
        cost_estimate=cost,
    )(x, w1, b1c, w2c, b2s)

    return out.reshape(B, 1)


def init_params(key, n_series, hidden=32):
    """nn.Linear-style init U(-1/sqrt(fan_in), 1/sqrt(fan_in)), PyTorch layouts."""
    k1, k2, k3, k4 = jax.random.split(key, 4)
    bound1 = 1.0 / jnp.sqrt(jnp.float32(n_series))
    bound2 = 1.0 / jnp.sqrt(jnp.float32(hidden))
    w1 = jax.random.uniform(k1, (hidden, n_series), jnp.float32, -bound1, bound1)
    b1 = jax.random.uniform(k2, (hidden,), jnp.float32, -bound1, bound1)
    w2 = jax.random.uniform(k3, (1, hidden), jnp.float32, -bound2, bound2)
    b2 = jax.random.uniform(k4, (1,), jnp.float32, -bound2, bound2)
    return w1, b1, w2, b2


def _reference(x, w1, b1, w2, b2):
    h = jnp.maximum(x @ w1.T + b1, 0.0)
    return jax.nn.sigmoid(h @ w2.T + b2)


if __name__ == "__main__":
    key = jax.random.PRNGKey(0)
    n_series = 4
    batch = 8

    kx, kp, kx2 = jax.random.split(key, 3)
    x = jax.random.normal(kx, (batch, n_series), jnp.float32)
    w1, b1, w2, b2 = init_params(kp, n_series)

    out = weight_discriminator(x, w1, b1, w2, b2)
    out = jax.block_until_ready(out)

    ref = _reference(x, w1, b1, w2, b2)
    assert out.shape == (batch, 1)
    assert jnp.allclose(out, ref, atol=1e-5, rtol=1e-5)

    # Non-multiple-of-128 batch with a forced small tile: exercises the
    # multi-step grid and the ragged final block (no wrapper-side padding).
    x2 = jax.random.normal(kx2, (300, n_series), jnp.float32)
    out2 = jax.block_until_ready(weight_discriminator(x2, w1, b1, w2, b2, tb=128))
    ref2 = _reference(x2, w1, b1, w2, b2)
    assert out2.shape == (300, 1)
    assert jnp.allclose(out2, ref2, atol=1e-5, rtol=1e-5)

    print("KERNEL_OK")
</pallas_src>

<mosaic_0001>
module attributes {stable_mosaic.version = 11 : i64} {
  func.func @_discriminator_kernel(%arg0: i32, %arg1: memref<8x4xf32, #tpu.memory_space<vmem>>, %arg2: memref<32x4xf32, #tpu.memory_space<vmem>>, %arg3: memref<32x1xf32, #tpu.memory_space<vmem>>, %arg4: memref<32x1xf32, #tpu.memory_space<vmem>>, %arg5: memref<1x1xf32, #tpu.memory_space<smem>>, %arg6: memref<1x8xf32, #tpu.memory_space<vmem>>) attributes {dimension_semantics = [#tpu.dimension_semantics<parallel>], iteration_bounds = array<i64: 1>, scalar_prefetch = 0 : i64, scratch_operands = 0 : i64, tpu.core_type = #tpu.core_type<tc>, window_params = [{transform_indices = @transform_0, window_bounds = array<i64: 8, 4>}, {pipeline_mode = #tpu.pipeline_mode<synchronous>, transform_indices = @transform_1, window_bounds = array<i64: 32, 4>}, {pipeline_mode = #tpu.pipeline_mode<synchronous>, transform_indices = @transform_2, window_bounds = array<i64: 32, 1>}, {pipeline_mode = #tpu.pipeline_mode<synchronous>, transform_indices = @transform_3, window_bounds = array<i64: 32, 1>}, {transform_indices = @transform_4, window_bounds = array<i64: 1, 1>}, {transform_indices = @transform_5, window_bounds = array<i64: 1, 8>}]} {
    %c0 = arith.constant 0 : index
    %c0_0 = arith.constant 0 : index
    %0 = vector.load %arg2[%c0, %c0_0] : memref<32x4xf32, #tpu.memory_space<vmem>>, vector<32x4xf32>
    %c0_1 = arith.constant 0 : index
    %c0_2 = arith.constant 0 : index
    %1 = vector.load %arg1[%c0_1, %c0_2] : memref<8x4xf32, #tpu.memory_space<vmem>>, vector<8x4xf32>
    %cst = arith.constant dense<0.000000e+00> : vector<32x8xf32>
    %2 = tpu.matmul %0, %1, %cst {dimension_numbers = #tpu.dot_dimension_numbers<[1], [1], [0], [0], [0, 0, 1, 0], [], []>} : vector<32x4xf32>, vector<8x4xf32>, vector<32x8xf32> -> vector<32x8xf32>
    %c0_3 = arith.constant 0 : index
    %c0_4 = arith.constant 0 : index
    %3 = vector.load %arg3[%c0_3, %c0_4] : memref<32x1xf32, #tpu.memory_space<vmem>>, vector<32x1xf32>
    %4 = vector.broadcast %3 : vector<32x1xf32> to vector<32x8xf32>
    %5 = arith.addf %2, %4 : vector<32x8xf32>
    %cst_5 = arith.constant 0.000000e+00 : f32
    %6 = vector.broadcast %cst_5 : f32 to vector<32x8xf32>
    %7 = arith.maximumf %5, %6 : vector<32x8xf32>
    %c0_6 = arith.constant 0 : index
    %c0_7 = arith.constant 0 : index
    %8 = vector.load %arg4[%c0_6, %c0_7] : memref<32x1xf32, #tpu.memory_space<vmem>>, vector<32x1xf32>
    %9 = vector.broadcast %8 : vector<32x1xf32> to vector<32x8xf32>
    %10 = arith.mulf %7, %9 : vector<32x8xf32>
    %cst_8 = arith.constant dense<0.000000e+00> : vector<8xf32>
    %11 = vector.multi_reduction <add>, %10, %cst_8 [0] : vector<32x8xf32> to vector<8xf32>
    %12 = vector.shape_cast %11 : vector<8xf32> to vector<1x8xf32>
    %c0_9 = arith.constant 0 : index
    %c0_10 = arith.constant 0 : index
    %13 = memref.load %arg5[%c0_9, %c0_10] : memref<1x1xf32, #tpu.memory_space<smem>>
    %14 = vector.broadcast %13 : f32 to vector<1x8xf32>
    %15 = arith.addf %12, %14 : vector<1x8xf32>
    %16 = arith.negf %15 : vector<1x8xf32>
    %17 = math.exp %16 : vector<1x8xf32>
    %cst_11 = arith.constant 1.000000e+00 : f32
    %18 = vector.broadcast %cst_11 : f32 to vector<1x8xf32>
    %19 = arith.addf %18, %17 : vector<1x8xf32>
    %20 = arith.divf %18, %19 : vector<1x8xf32>
    %c0_12 = arith.constant 0 : index
    %c0_13 = arith.constant 0 : index
    %21 = vector.load %arg6[%c0_12, %c0_13] : memref<1x8xf32, #tpu.memory_space<vmem>>, vector<1x8xf32>
    tpu.vector_store %arg6[%c0_12, %c0_13], %20 {strides = array<i32>} : memref<1x8xf32, #tpu.memory_space<vmem>>, vector<1x8xf32>,
    return
  }
  func.func @transform_0(%arg0: i32) -> (i32, i32) {
    %c0_i32 = arith.constant 0 : i32
    %c0_i32_0 = arith.constant 0 : i32
    return %arg0, %c0_i32 : i32, i32
  }
  func.func @transform_1(%arg0: i32) -> (i32, i32) {
    %c0_i32 = arith.constant 0 : i32
    %c0_i32_0 = arith.constant 0 : i32
    %c0_i32_1 = arith.constant 0 : i32
    return %c0_i32, %c0_i32_0 : i32, i32
  }
  func.func @transform_2(%arg0: i32) -> (i32, i32) {
    %c0_i32 = arith.constant 0 : i32
    %c0_i32_0 = arith.constant 0 : i32
    %c0_i32_1 = arith.constant 0 : i32
    return %c0_i32, %c0_i32_0 : i32, i32
  }
  func.func @transform_3(%arg0: i32) -> (i32, i32) {
    %c0_i32 = arith.constant 0 : i32
    %c0_i32_0 = arith.constant 0 : i32
    %c0_i32_1 = arith.constant 0 : i32
    return %c0_i32, %c0_i32_0 : i32, i32
  }
  func.func @transform_4(%arg0: i32) -> (i32, i32) {
    %c0_i32 = arith.constant 0 : i32
    %c0_i32_0 = arith.constant 0 : i32
    %c0_i32_1 = arith.constant 0 : i32
    return %c0_i32, %c0_i32_0 : i32, i32
  }
  func.func @transform_5(%arg0: i32) -> (i32, i32) {
    %c0_i32 = arith.constant 0 : i32
    %c0_i32_0 = arith.constant 0 : i32
    return %c0_i32, %arg0 : i32, i32
  }
}

</mosaic_0001>

<llo_original>
// kernel: tpu_custom_call.1
$region0: #{tpu_custom_call.1}
  #allocation0 [shape = 'u32[]', space=smem, size = 0x4, offset = 0x4, fixed_abs, tag = 'smem constant byte address 0x4 - core index']
  #allocation1 [shape = 'u32[144,128]{1,0:T(1,128)}', space=vmem, size = 0x12000, scoped, tag = 'internal scratch']
  #allocation2 [shape = 'f32[1,1]{1,0:T(1,128)S(6)}', space=smem, size = 0x200, scoped, tag = 'scoped memory for tpu_custom_call.1']
  %s0 = inlined_call_operand.vmem [shape: f32[8,4], index: 0, kind: input, shape index: {}]
  %s1 = inlined_call_operand.vmem [shape: f32[32,4], index: 1, kind: input, shape index: {}]
  %s2 = inlined_call_operand.vmem [shape: f32[32,1], index: 2, kind: input, shape index: {}]
  %s3 = inlined_call_operand.vmem [shape: f32[32,1], index: 3, kind: input, shape index: {}]
  %s4 = inlined_call_operand.<no memory space> [shape: f32[1,1], index: 4, kind: input, shape index: {}]
  %s5 = inlined_call_operand.hbm [shape: f32[1,8], index: 5, kind: output, shape index: {}]
  %s6 = sld [smem:[#allocation0]]
  $region30: #{tpu_custom_call.1} parent=0
    _
  %s8 = ssub.s32 1, %s6
  %s9 = scalar_select 0, %s8, %s6
  %10 = sst [smem:[#allocation2]] %s4
  $region1: #{tpu_custom_call.1} parent=0
    #allocation3 [shape = 'u8[512]{0}', space=vmem, size = 0x400, scoped, tag = 'output window, operand 0, single buffered']
    #allocation4 [shape = 's32[1]{0}', space=sflag, size = 0x4, scoped, tag = 'scoped memory for tpu_custom_call.1']
    %11 = vsyncpa [#allocation4], 0
    // Predicated region
    $region2: #{tpu_custom_call.1} parent=1 // pred_check
      _
    $region3: #{tpu_custom_call.1} parent=1 // pred_check_branch
      %13 = sbr.rel (0) target = $region5
    $region4: #{tpu_custom_call.1} parent=1 // pred_region
      _
    $region5: #{tpu_custom_call.1} parent=1 // pred_fallthru
      _
    // Predicated region
    $region6: #{tpu_custom_call.1} parent=1 // pred_check
      _
    $region7: #{tpu_custom_call.1} parent=1 // pred_check_branch
      %15 = sbr.rel (0) target = $region9
    $region8: #{tpu_custom_call.1} parent=1 // pred_region
      _
    $region9: #{tpu_custom_call.1} parent=1 // pred_fallthru
      _
    // Predicated region
    $region10: #{tpu_custom_call.1} parent=1 // pred_check
      _
    $region11: #{tpu_custom_call.1} parent=1 // pred_check_branch
      %17 = sbr.rel (0) target = $region13
    $region12: #{tpu_custom_call.1} parent=1 // pred_region
      _
    $region13: #{tpu_custom_call.1} parent=1 // pred_fallthru
      _
    // Predicated region
    $region14: #{tpu_custom_call.1} parent=1 // pred_check
      _
    $region15: #{tpu_custom_call.1} parent=1 // pred_check_branch
      %19 = sbr.rel (0) target = $region17
    $region16: #{tpu_custom_call.1} parent=1 // pred_region
      _
    $region17: #{tpu_custom_call.1} parent=1 // pred_fallthru
      _
    // Predicated region
    $region18: #{tpu_custom_call.1} parent=1 // pred_check
      _
    $region19: #{tpu_custom_call.1} parent=1 // pred_check_branch
      %21 = sbr.rel (0) target = $region21
    $region20: #{tpu_custom_call.1} parent=1 // pred_region
      _
    $region21: #{tpu_custom_call.1} parent=1 // pred_fallthru
      _
    %v22 = vld [vmem:[%s1] sm:$0xff]
    %v23 = vld [vmem:[%s1 + $0x8] sm:$0xff]
    %v24 = vld [vmem:[%s1 + $0x10] sm:$0xff]
    %v25 = vld [vmem:[%s1 + $0x18] sm:$0xff]
    %v26 = vld [vmem:[%s0] sm:$0xff]
    %v27 = vld [vmem:[%s2] sm:$0xff]
    %v28 = vld [vmem:[%s2 + $0x8] sm:$0xff]
    %v29 = vld [vmem:[%s2 + $0x10] sm:$0xff]
    %v30 = vld [vmem:[%s2 + $0x18] sm:$0xff]
    %32 = vset.pattern.permute.xlu0 0
    %33 = vperm.xlu0 %32, %v27
    %v34 = vpop.permute.xlu0 %33
    %37 = vset.pattern.permute.xlu0 0
    %38 = vperm.xlu0 %37, %v28
    %v39 = vpop.permute.xlu0 %38
    %42 = vset.pattern.permute.xlu0 0
    %43 = vperm.xlu0 %42, %v29
    %v44 = vpop.permute.xlu0 %43
    %47 = vset.pattern.permute.xlu0 0
    %48 = vperm.xlu0 %47, %v30
    %v49 = vpop.permute.xlu0 %48
    %vm51 = vcmask 31744
    %v53 = vsel %vm51, %v22, 0
    %v56 = vsel %vm51, %v23, 0
    %v59 = vsel %vm51, %v24, 0
    %v62 = vsel %vm51, %v25, 0
    %v65 = vsel %vm51, %v26, 0
    %67 = vmatprep.subr.mxu0 0.0
    %68 = vmatpush1.xpose.msra.mxu0 0.0
    %69 = vmatprep.subr.mxu0 0.0
    %70 = vmatpush1.xpose.msra.mxu0 0.0
    %71 = vmatprep.subr.mxu0 0.0
    %72 = vmatpush1.xpose.msra.mxu0 0.0
    %73 = vmatprep.subr.mxu0 0.0
    %74 = vmatpush1.xpose.msra.mxu0 0.0
    %75 = vmatprep.subr.mxu0 0.0
    %76 = vmatpush1.xpose.msra.mxu0 0.0
    %77 = vmatprep.subr.mxu0 0.0
    %78 = vmatpush1.xpose.msra.mxu0 0.0
    %79 = vmatprep.subr.mxu0 0.0
    %80 = vmatpush1.xpose.msra.mxu0 0.0
    %81 = vmatprep.subr.mxu0 0.0
    %82 = vmatpush1.xpose.msra.mxu0 0.0
    %83 = vmatprep.subr.mxu0 0.0
    %84 = vmatpush1.xpose.msra.mxu0 0.0
    %85 = vmatprep.subr.mxu0 0.0
    %86 = vmatpush1.xpose.msra.mxu0 0.0
    %87 = vmatprep.subr.mxu0 0.0
    %88 = vmatpush1.xpose.msra.mxu0 0.0
    %89 = vmatprep.subr.mxu0 0.0
    %90 = vmatpush1.xpose.msra.mxu0 0.0
    %91 = vmatprep.subr.mxu0 0.0
    %92 = vmatpush1.xpose.msra.mxu0 0.0
    %93 = vmatprep.subr.mxu0 0.0
    %94 = vmatpush1.xpose.msra.mxu0 0.0
    %95 = vmatprep.subr.mxu0 0.0
    %96 = vmatpush1.xpose.msra.mxu0 0.0
    %97 = vmatprep.subr.mxu0 0.0
    %98 = vmatpush1.xpose.msra.mxu0 %v65
    %99 = vmatprep.subr.mxu0 0.0
    %100 = vmatpush2.xpose.msra.mxu0 0.0
    %101 = vmatprep.subr.mxu0 0.0
    %102 = vmatpush2.xpose.msra.mxu0 0.0
    %103 = vmatprep.subr.mxu0 0.0
    %104 = vmatpush2.xpose.msra.mxu0 0.0
    %105 = vmatprep.subr.mxu0 0.0
    %106 = vmatpush2.xpose.msra.mxu0 0.0
    %107 = vmatprep.subr.mxu0 0.0
    %108 = vmatpush2.xpose.msra.mxu0 0.0
    %109 = vmatprep.subr.mxu0 0.0
    %110 = vmatpush2.xpose.msra.mxu0 0.0
    %111 = vmatprep.subr.mxu0 0.0
    %112 = vmatpush2.xpose.msra.mxu0 0.0
    %113 = vmatprep.subr.mxu0 0.0
    %114 = vmatpush2.xpose.msra.mxu0 0.0
    %115 = vmatprep.subr.mxu0 0.0
    %116 = vmatpush2.xpose.msra.mxu0 0.0
    %117 = vmatprep.subr.mxu0 0.0
    %118 = vmatpush2.xpose.msra.mxu0 0.0
    %119 = vmatprep.subr.mxu0 0.0
    %120 = vmatpush2.xpose.msra.mxu0 0.0
    %121 = vmatprep.subr.mxu0 0.0
    %122 = vmatpush2.xpose.msra.mxu0 0.0
    %123 = vmatprep.subr.mxu0 0.0
    %124 = vmatpush2.xpose.msra.mxu0 0.0
    %125 = vmatprep.subr.mxu0 0.0
    %126 = vmatpush2.xpose.msra.mxu0 0.0
    %127 = vmatprep.subr.mxu0 0.0
    %128 = vmatpush2.xpose.msra.mxu0 0.0
    %129 = vmatprep.subr.mxu0 0.0
    %130 = vmatpush2.xpose.msra.mxu0 0.0
    %131 = vmatprep.mubr.f32.mxu0 0.0
    %132 = vmatmul.mubr.f32.gmra.mxu0 %v53
    %v133 = vpop.f32.mrf.mxu0
    %v134 = vadd.f32 %v34, %v133
    %v135 = vpop.f32.mrf.mxu0
    %136 = vmatprep.mubr.f32.mxu0 0.0
    %137 = vmatmul.mubr.f32.gmra.mxu0 %v56
    %v138 = vpop.f32.mrf.mxu0
    %v139 = vadd.f32 %v39, %v138
    %v140 = vpop.f32.mrf.mxu0
    %141 = vmatprep.mubr.f32.mxu0 0.0
    %142 = vmatmul.mubr.f32.gmra.mxu0 %v59
    %v143 = vpop.f32.mrf.mxu0
    %v144 = vadd.f32 %v44, %v143
    %v145 = vpop.f32.mrf.mxu0
    %146 = vmatprep.mubr.f32.mxu0 0.0
    %147 = vmatmul.mubr.f32.gmra.mxu0 %v62
    %v148 = vpop.f32.mrf.mxu0
    %v149 = vadd.f32 %v49, %v148
    %v150 = vpop.f32.mrf.mxu0
    %151 = vdwg.mxu0
    %v152 = vmax.f32 %v134, 0.0
    %v153 = vmax.f32 %v139, 0.0
    %v154 = vmax.f32 %v144, 0.0
    %v155 = vmax.f32 %v149, 0.0
    %v156 = vld [vmem:[%s3] sm:$0xff]
    %v157 = vld [vmem:[%s3 + $0x8] sm:$0xff]
    %v158 = vld [vmem:[%s3 + $0x10] sm:$0xff]
    %v159 = vld [vmem:[%s3 + $0x18] sm:$0xff]
    %161 = vset.pattern.permute.xlu0 0
    %162 = vperm.xlu0 %161, %v156
    %v163 = vpop.permute.xlu0 %162
    %166 = vset.pattern.permute.xlu0 0
    %167 = vperm.xlu0 %166, %v157
    %v168 = vpop.permute.xlu0 %167
    %171 = vset.pattern.permute.xlu0 0
    %172 = vperm.xlu0 %171, %v158
    %v173 = vpop.permute.xlu0 %172
    %176 = vset.pattern.permute.xlu0 0
    %177 = vperm.xlu0 %176, %v159
    %v178 = vpop.permute.xlu0 %177
    %v180 = vmul.f32 %v152, %v163
    %v181 = vmul.f32 %v153, %v168
    %v182 = vmul.f32 %v154, %v173
    %v183 = vmul.f32 %v155, %v178
    %vm184 = vcmask 64512
    %v185 = vsel %vm184, %v180, 0.0
    %v186 = vsel %vm184, %v181, 0.0
    %v187 = vadd.f32 %v185, %v186
    %v188 = vsel %vm184, %v182, 0.0
    %v189 = vadd.f32 %v187, %v188
    %v190 = vsel %vm184, %v183, 0.0
    %v191 = vadd.f32 %v189, %v190
    %v192 = vrot.slane %v191, 4
    %v193 = vadd.f32 %v191, %v192
    %v194 = vrot.slane %v193, 2
    %v195 = vadd.f32 %v193, %v194
    %v196 = vrot.slane %v195, 1
    %v197 = vadd.f32 %v195, %v196
    %s198 = sld [smem:[#allocation2]]
    %v199 = vstv %s198
    %v200 = vadd.f32 %v197, %v199
    %v201 = vxor.u32 %v200, 2147483648
    %v202 = vmul.f32 %v201, 1.442695
    %v203 = vpow.pop %v202
    %v204 = vadd.f32 %v203, 1.0
    %v205 = vrcp.pop %v204
    %v206 = vmul.f32 1.0, %v205
    %vm207 = vcmask 57344
    %208 = vst.msk [vmem:[#allocation3] sm:$0x1] %vm207, %v206
    // Predicated region
    $region22: #{tpu_custom_call.1} parent=1 // pred_check
      _
    $region23: #{tpu_custom_call.1} parent=1 // pred_check_branch
      %210 = sbr.rel (0) target = $region25
    $region24: #{tpu_custom_call.1} parent=1 // pred_region
      %s212 = ssub.s32 16, 16
      %213 = vsyncadd [#allocation4], %s212
      %s215 = sshll.u32 [#allocation3], 4
      %s216 = int_to_ptr.vmem [resolvable:$true] %s215
      %218 = dma.vmem_to_hbm [thread:$0]  %s216, 16, %s5, [#allocation4]
    $region25: #{tpu_custom_call.1} parent=1 // pred_fallthru
      _
    // Predicated region
    $region26: #{tpu_custom_call.1} parent=1 // pred_check
      _
    $region27: #{tpu_custom_call.1} parent=1 // pred_check_branch
      %220 = sbr.rel (0) target = $region29
    $region28: #{tpu_custom_call.1} parent=1 // pred_region
      %221 = dma.done [#allocation4], 16
    $region29: #{tpu_custom_call.1} parent=1 // pred_fallthru
      _
    %222 = vsyncpa [#allocation4], 1

</llo_original>
